<compile_context>
chip_gen: v6e
topology: v6e:2x2x1
jax: 0.10.0
libtpu: 0.0.40
codegen_flags: <defaults>
</compile_context>

<pallas_src>
import functools
import math

import jax
import jax.numpy as jnp
from jax.experimental import pallas as pl
from jax.experimental.pallas import tpu as pltpu

_LANE = 128


def _round_up(x, m):
    return (x + m - 1) // m * m


def _sublane_pack(dtype):
    """Rows per sublane pack for a matmul LHS of this dtype (f32->8, bf16->16)."""
    return max(8, 32 // jnp.dtype(dtype).itemsize)


def _vmem_capacity_bytes():
    try:
        return int(pltpu.get_tpu_info().vmem_capacity_bytes)
    except Exception:
        return 64 << 20  # v7x per-TC VMEM; smallest of the current generations.


# ----------------------------------------------------------------------------
# Fused kernel: whole MLP for one batch tile, all weights VMEM-resident.
# ----------------------------------------------------------------------------
def _fused_mlp_kernel(*refs, n_layers, matmul_dtype):
    """refs = (x_ref, w0_ref, b0_ref, ..., w{L-1}_ref, b{L-1}_ref, o_ref).

    h = ReLU(h @ w_i + b_i) for all but the last layer, final Linear without
    activation.  Matmul operands are `matmul_dtype`; accumulation and the
    bias/ReLU epilogue are f32; the inter-layer carry is cast back to
    `matmul_dtype` once per layer.
    """
    x_ref = refs[0]
    o_ref = refs[-1]
    layer_refs = refs[1:-1]

    h = x_ref[...]
    if h.dtype != matmul_dtype:
        h = h.astype(matmul_dtype)
    for i in range(n_layers):
        w_ref = layer_refs[2 * i]
        b_ref = layer_refs[2 * i + 1]
        acc = jnp.dot(h, w_ref[...], preferred_element_type=jnp.float32)
        acc = acc + b_ref[...]                      # [TB, Np] + [1, Np], f32
        if i != n_layers - 1:
            acc = jnp.maximum(acc, 0.0)
            h = acc.astype(matmul_dtype)            # bf16 carry between layers
        else:
            h = acc
    o_ref[...] = h.astype(o_ref.dtype)


# ----------------------------------------------------------------------------
# Parameter construction / preparation.
# ----------------------------------------------------------------------------
def init_classification_head_params(key, in_dim=384, hidden_dims=None,
                                    out_dim=9, n_hidden=1, dtype=jnp.float32):
    """nn.Linear default init (uniform +-1/sqrt(fan_in)).
    Returns [(w [fan_in, fan_out], b [fan_out]), ...] in f32."""
    if hidden_dims is not None and isinstance(hidden_dims, int):
        hidden_dims = [hidden_dims] * n_hidden
    dims = ([in_dim, out_dim] if hidden_dims is None
            else [in_dim] + list(hidden_dims) + [out_dim])
    params = []
    for i in range(len(dims) - 1):
        fan_in, fan_out = dims[i], dims[i + 1]
        key, kw, kb = jax.random.split(key, 3)
        bound = 1.0 / math.sqrt(fan_in)
        w = jax.random.uniform(kw, (fan_in, fan_out), dtype, -bound, bound)
        b = jax.random.uniform(kb, (fan_out,), dtype, -bound, bound)
        params.append((w, b))
    return params


def prepare_classification_head_params(params, weight_dtype=jnp.bfloat16):
    """Zero-pad every fan_in/fan_out up to a multiple of 128 (lane-dense),
    cast weights to `weight_dtype`, keep biases f32 for the f32 epilogue."""
    prepared = []
    prev_pad = _round_up(params[0][0].shape[0], _LANE)
    prev_real = params[0][0].shape[0]
    for (w, b) in params:
        fan_in, fan_out = w.shape
        assert fan_in == prev_real, "layer dims must chain"
        out_pad = _round_up(fan_out, _LANE)
        w_p = jnp.zeros((prev_pad, out_pad), dtype=weight_dtype)
        w_p = w_p.at[:fan_in, :fan_out].set(w.astype(weight_dtype))
        b_p = jnp.zeros((1, out_pad), dtype=jnp.float32)
        b_p = b_p.at[:, :fan_out].set(b.reshape(1, -1).astype(jnp.float32))
        prepared.append((w_p, b_p))
        prev_pad, prev_real = out_pad, fan_out
    return prepared


# ----------------------------------------------------------------------------
# Forward wrapper: one pallas_call, batch-gridded.
# ----------------------------------------------------------------------------
def classification_head_forward(x, prepared_params, out_dim, *, tile_b=256):
    """Mirrors ClassificationHead.forward (Linear(+ReLU) chain, final Linear).

    Dropout (if configured in the torch module) is identity at inference and
    the module default is dropout=None, so nothing is applied.
    tile_b: batch tile; 256 for v6e/v7x, use 128 on v5e.
    """
    # TODO(synk): training-mode Dropout (stochastic masking) not implemented.
    B, K = x.shape
    matmul_dtype = prepared_params[0][0].dtype
    for w, b in prepared_params:
        assert w.dtype == matmul_dtype, "all layers must share one weight dtype"
        assert b.dtype == jnp.float32, "biases must be f32 (f32 epilogue)"
    K_pad = prepared_params[0][0].shape[0]
    N_pad = prepared_params[-1][0].shape[1]
    n_layers = len(prepared_params)
    out_dtype = x.dtype

    # ---- batch tiling -------------------------------------------------------
    pack = _sublane_pack(matmul_dtype)          # clean MXU LHS sublane pack
    tb = max(_round_up(tile_b, pack), pack)
    b_pad = _round_up(B, pack)
    if b_pad <= tb:
        tb = b_pad                               # whole batch in one tile
    b_pad = _round_up(b_pad, tb)
    grid_m = b_pad // tb

    # Pad batch (sublane pack / tile) and features (lane) in one pad.
    # TODO(synk): for large B with a ragged in_dim, zero-fill K inside the
    # kernel (VMEM memset) instead of this HBM round-trip.
    if b_pad != B or K_pad != K:
        x = jnp.pad(x, ((0, b_pad - B), (0, K_pad - K)))

    # ---- VMEM budget guard (v7x: 64 MiB physical; v5e: 16 MiB scoped default)
    w_bytes = sum(w.size * w.dtype.itemsize + b.size * b.dtype.itemsize
                  for w, b in prepared_params)
    widest = max([K_pad] + [w.shape[1] for w, _ in prepared_params])
    act_bytes = (tb * K_pad * x.dtype.itemsize
                 + tb * N_pad * jnp.dtype(out_dtype).itemsize)
    scratch_bytes = 2 * tb * widest * 4          # f32 intermediates in the body
    needed = 2 * (w_bytes + act_bytes) + scratch_bytes   # x2: double-buffering
    vmem_limit = int(min(_vmem_capacity_bytes(),
                         max(needed + (4 << 20), 32 << 20)))
    # TODO(synk): if `needed` exceeds physical VMEM (huge hidden_dims), add a
    # K/N-tiled reduction grid instead of the fully fused body.

    flat_inputs = [x]
    for w, b in prepared_params:
        flat_inputs.extend([w, b])

    in_specs = [pl.BlockSpec((tb, K_pad), lambda i: (i, 0))]
    for w, b in prepared_params:
        in_specs.append(pl.BlockSpec(w.shape, lambda i: (0, 0)))   # resident
        in_specs.append(pl.BlockSpec(b.shape, lambda i: (0, 0)))   # resident

    flops = sum(2 * b_pad * w.shape[0] * w.shape[1] for w, _ in prepared_params)
    bytes_accessed = (x.size * x.dtype.itemsize
                      + b_pad * N_pad * jnp.dtype(out_dtype).itemsize
                      + w_bytes)

    kernel = functools.partial(_fused_mlp_kernel, n_layers=n_layers,
                               matmul_dtype=matmul_dtype)
    out_padded = pl.pallas_call(
        kernel,
        out_shape=jax.ShapeDtypeStruct((b_pad, N_pad), out_dtype),
        grid=(grid_m,),
        in_specs=in_specs,
        out_specs=pl.BlockSpec((tb, N_pad), lambda i: (i, 0)),
        compiler_params=pltpu.CompilerParams(
            dimension_semantics=("parallel",),   # v7x: shard tiles over 2 TCs
            vmem_limit_bytes=vmem_limit),
        cost_estimate=pl.CostEstimate(flops=int(flops), transcendentals=0,
                                      bytes_accessed=int(bytes_accessed)),
    )(*flat_inputs)
    return out_padded[:B, :out_dim]


# ----------------------------------------------------------------------------
# Demo / correctness check.
# ----------------------------------------------------------------------------
if __name__ == "__main__":
    key = jax.random.PRNGKey(0)
    k_in, k_param, k_big = jax.random.split(key, 3)

    batch, in_dim, hidden, out_dim = 8, 384, 256, 9
    x = jax.random.normal(k_in, (batch, in_dim), dtype=jnp.float32)

    raw_params = init_classification_head_params(
        k_param, in_dim=in_dim, hidden_dims=hidden, out_dim=out_dim, n_hidden=1)

    def ref_forward(xr, params, dt):
        h = xr.astype(dt)
        for i, (w, b) in enumerate(params):
            acc = jnp.dot(h, w.astype(dt),
                          preferred_element_type=jnp.float32) + b.reshape(1, -1)
            if i != len(params) - 1:
                h = jnp.maximum(acc, 0.0).astype(dt)
            else:
                h = acc
        return h

    # ---- f32-weight path: strict check -------------------------------------
    params_f32 = prepare_classification_head_params(raw_params,
                                                    weight_dtype=jnp.float32)
    out_f32 = jax.block_until_ready(
        classification_head_forward(x, params_f32, out_dim=out_dim))
    ref_f32 = ref_forward(x, raw_params, jnp.float32)
    assert out_f32.shape == (batch, out_dim)
    assert jnp.allclose(out_f32, ref_f32, atol=1e-5, rtol=1e-5)

    # ---- bf16-weight path (default), small batch -> grid of 1 --------------
    params_bf16 = prepare_classification_head_params(raw_params)
    out_bf16 = jax.block_until_ready(
        classification_head_forward(x, params_bf16, out_dim=out_dim))
    ref_bf16 = ref_forward(x, raw_params, jnp.bfloat16)
    assert out_bf16.shape == (batch, out_dim)
    assert jnp.allclose(out_bf16, ref_bf16.astype(out_bf16.dtype),
                        atol=2e-2, rtol=2e-2)

    # ---- bf16, larger batch -> exercises the batch grid (TB=256, grid=2) ---
    big_batch = 512
    xb = jax.random.normal(k_big, (big_batch, in_dim), dtype=jnp.float32)
    out_big = jax.block_until_ready(
        classification_head_forward(xb, params_bf16, out_dim=out_dim))
    ref_big = ref_forward(xb, raw_params, jnp.bfloat16)
    assert out_big.shape == (big_batch, out_dim)
    assert jnp.allclose(out_big, ref_big.astype(out_big.dtype),
                        atol=2e-2, rtol=2e-2)

    # ---- hidden_dims=None path (single Linear) ------------------------------
    raw_single = init_classification_head_params(
        k_param, in_dim=in_dim, hidden_dims=None, out_dim=out_dim)
    params_single = prepare_classification_head_params(raw_single,
                                                       weight_dtype=jnp.float32)
    out_single = jax.block_until_ready(
        classification_head_forward(x, params_single, out_dim=out_dim))
    ref_single = ref_forward(x, raw_single, jnp.float32)
    assert jnp.allclose(out_single, ref_single, atol=1e-5, rtol=1e-5)

    print("KERNEL_OK")
</pallas_src>

<mosaic_0001>
module attributes {stable_mosaic.version = 11 : i64} {
  func.func @_fused_mlp_kernel(%arg0: i32, %arg1: memref<8x384xf32, #tpu.memory_space<vmem>>, %arg2: memref<384x256xf32, #tpu.memory_space<vmem>>, %arg3: memref<1x256xf32, #tpu.memory_space<vmem>>, %arg4: memref<256x128xf32, #tpu.memory_space<vmem>>, %arg5: memref<1x128xf32, #tpu.memory_space<vmem>>, %arg6: memref<8x128xf32, #tpu.memory_space<vmem>>) attributes {dimension_semantics = [#tpu.dimension_semantics<parallel>], iteration_bounds = array<i64: 1>, scalar_prefetch = 0 : i64, scratch_operands = 0 : i64, tpu.core_type = #tpu.core_type<tc>, window_params = [{transform_indices = @transform_0, window_bounds = array<i64: 8, 384>}, {pipeline_mode = #tpu.pipeline_mode<synchronous>, transform_indices = @transform_1, window_bounds = array<i64: 384, 256>}, {pipeline_mode = #tpu.pipeline_mode<synchronous>, transform_indices = @transform_2, window_bounds = array<i64: 1, 256>}, {pipeline_mode = #tpu.pipeline_mode<synchronous>, transform_indices = @transform_3, window_bounds = array<i64: 256, 128>}, {pipeline_mode = #tpu.pipeline_mode<synchronous>, transform_indices = @transform_4, window_bounds = array<i64: 1, 128>}, {transform_indices = @transform_5, window_bounds = array<i64: 8, 128>}]} {
    %c0 = arith.constant 0 : index
    %c0_0 = arith.constant 0 : index
    %0 = vector.load %arg1[%c0, %c0_0] : memref<8x384xf32, #tpu.memory_space<vmem>>, vector<8x384xf32>
    %c0_1 = arith.constant 0 : index
    %c0_2 = arith.constant 0 : index
    %1 = vector.load %arg2[%c0_1, %c0_2] : memref<384x256xf32, #tpu.memory_space<vmem>>, vector<384x256xf32>
    %cst = arith.constant dense<0.000000e+00> : vector<8x256xf32>
    %2 = tpu.matmul %0, %1, %cst {dimension_numbers = #tpu.dot_dimension_numbers<[1], [0], [0], [1], [0, 0, 1, 1], [], []>} : vector<8x384xf32>, vector<384x256xf32>, vector<8x256xf32> -> vector<8x256xf32>
    %c0_3 = arith.constant 0 : index
    %c0_4 = arith.constant 0 : index
    %3 = vector.load %arg3[%c0_3, %c0_4] : memref<1x256xf32, #tpu.memory_space<vmem>>, vector<1x256xf32>
    %4 = vector.broadcast %3 : vector<1x256xf32> to vector<8x256xf32>
    %5 = arith.addf %2, %4 : vector<8x256xf32>
    %cst_5 = arith.constant 0.000000e+00 : f32
    %6 = vector.broadcast %cst_5 : f32 to vector<8x256xf32>
    %7 = arith.maximumf %5, %6 : vector<8x256xf32>
    %c0_6 = arith.constant 0 : index
    %c0_7 = arith.constant 0 : index
    %8 = vector.load %arg4[%c0_6, %c0_7] : memref<256x128xf32, #tpu.memory_space<vmem>>, vector<256x128xf32>
    %cst_8 = arith.constant dense<0.000000e+00> : vector<8x128xf32>
    %9 = tpu.matmul %7, %8, %cst_8 {dimension_numbers = #tpu.dot_dimension_numbers<[1], [0], [0], [1], [0, 0, 1, 1], [], []>} : vector<8x256xf32>, vector<256x128xf32>, vector<8x128xf32> -> vector<8x128xf32>
    %c0_9 = arith.constant 0 : index
    %c0_10 = arith.constant 0 : index
    %10 = vector.load %arg5[%c0_9, %c0_10] : memref<1x128xf32, #tpu.memory_space<vmem>>, vector<1x128xf32>
    %11 = vector.broadcast %10 : vector<1x128xf32> to vector<8x128xf32>
    %12 = arith.addf %9, %11 : vector<8x128xf32>
    %c0_11 = arith.constant 0 : index
    %c0_12 = arith.constant 0 : index
    %13 = vector.load %arg6[%c0_11, %c0_12] : memref<8x128xf32, #tpu.memory_space<vmem>>, vector<8x128xf32>
    tpu.vector_store %arg6[%c0_11, %c0_12], %12 {strides = array<i32>} : memref<8x128xf32, #tpu.memory_space<vmem>>, vector<8x128xf32>,
    return
  }
  func.func @transform_0(%arg0: i32) -> (i32, i32) {
    %c0_i32 = arith.constant 0 : i32
    %c0_i32_0 = arith.constant 0 : i32
    return %arg0, %c0_i32 : i32, i32
  }
  func.func @transform_1(%arg0: i32) -> (i32, i32) {
    %c0_i32 = arith.constant 0 : i32
    %c0_i32_0 = arith.constant 0 : i32
    %c0_i32_1 = arith.constant 0 : i32
    return %c0_i32, %c0_i32_0 : i32, i32
  }
  func.func @transform_2(%arg0: i32) -> (i32, i32) {
    %c0_i32 = arith.constant 0 : i32
    %c0_i32_0 = arith.constant 0 : i32
    %c0_i32_1 = arith.constant 0 : i32
    return %c0_i32, %c0_i32_0 : i32, i32
  }
  func.func @transform_3(%arg0: i32) -> (i32, i32) {
    %c0_i32 = arith.constant 0 : i32
    %c0_i32_0 = arith.constant 0 : i32
    %c0_i32_1 = arith.constant 0 : i32
    return %c0_i32, %c0_i32_0 : i32, i32
  }
  func.func @transform_4(%arg0: i32) -> (i32, i32) {
    %c0_i32 = arith.constant 0 : i32
    %c0_i32_0 = arith.constant 0 : i32
    %c0_i32_1 = arith.constant 0 : i32
    return %c0_i32, %c0_i32_0 : i32, i32
  }
  func.func @transform_5(%arg0: i32) -> (i32, i32) {
    %c0_i32 = arith.constant 0 : i32
    %c0_i32_0 = arith.constant 0 : i32
    return %arg0, %c0_i32 : i32, i32
  }
}

</mosaic_0001>

<llo_original>
// kernel: tpu_custom_call.1
$region0: #{tpu_custom_call.1}
  #allocation0 [shape = 'u32[]', space=smem, size = 0x4, offset = 0x4, fixed_abs, tag = 'smem constant byte address 0x4 - core index']
  #allocation1 [shape = 'u32[144,128]{1,0:T(1,128)}', space=vmem, size = 0x12000, scoped, tag = 'internal scratch']
  %s0 = inlined_call_operand.hbm [shape: f32[8,384], index: 0, kind: input, shape index: {}]
  %s1 = inlined_call_operand.hbm [shape: f32[384,256], index: 1, kind: input, shape index: {}]
  %s2 = inlined_call_operand.vmem [shape: f32[1,256], index: 2, kind: input, shape index: {}]
  %s3 = inlined_call_operand.hbm [shape: f32[256,128], index: 3, kind: input, shape index: {}]
  %s4 = inlined_call_operand.vmem [shape: f32[1,128], index: 4, kind: input, shape index: {}]
  %s5 = inlined_call_operand.hbm [shape: f32[8,128], index: 5, kind: output, shape index: {}]
  %s6 = sld [smem:[#allocation0]]
  $region42: #{tpu_custom_call.1} parent=0
    _
  %s8 = ssub.s32 1, %s6
  %s9 = scalar_select 0, %s8, %s6
  $region1: #{tpu_custom_call.1} parent=0
    #allocation2 [shape = 'u8[12288]{0}', space=vmem, size = 0x3000, scoped, tag = 'input window, operand 0, single buffered']
    #allocation3 [shape = 's32[1]{0}', space=sflag, size = 0x4, scoped, tag = 'scoped memory for tpu_custom_call.1']
    #allocation4 [shape = 's32[1]{0}', space=sflag, size = 0x4, scoped, tag = 'scoped memory for tpu_custom_call.1']
    #allocation5 [shape = 'u8[393216]{0}', space=vmem, size = 0x60000, scoped, tag = 'input window, operand 1, single buffered']
    #allocation6 [shape = 's32[1]{0}', space=sflag, size = 0x4, scoped, tag = 'scoped memory for tpu_custom_call.1']
    #allocation7 [shape = 'u8[131072]{0}', space=vmem, size = 0x20000, scoped, tag = 'input window, operand 3, single buffered']
    #allocation8 [shape = 'u8[4096]{0}', space=vmem, size = 0x1000, scoped, tag = 'output window, operand 0, single buffered']
    %10 = vsyncpa [#allocation3], 0
    %11 = vsyncpa [#allocation6], 0
    %12 = vsyncpa [#allocation4], 0
    // Predicated region
    $region2: #{tpu_custom_call.1} parent=1 // pred_check
      _
    $region3: #{tpu_custom_call.1} parent=1 // pred_check_branch
      %14 = sbr.rel (0) target = $region5
    $region4: #{tpu_custom_call.1} parent=1 // pred_region
      %s16 = ssub.s32 384, 384
      %17 = vsyncadd [#allocation3], %s16
      %s19 = sshll.u32 [#allocation2], 4
      %s20 = int_to_ptr.vmem [resolvable:$true] %s19
      %22 = dma.hbm_to_vmem [thread:$0]  %s0, 384, %s20, [#allocation3]
    $region5: #{tpu_custom_call.1} parent=1 // pred_fallthru
      _
    // Predicated region
    $region6: #{tpu_custom_call.1} parent=1 // pred_check
      _
    $region7: #{tpu_custom_call.1} parent=1 // pred_check_branch
      %24 = sbr.rel (0) target = $region9
    $region8: #{tpu_custom_call.1} parent=1 // pred_region
      %s26 = ssub.s32 12288, 12288
      %27 = vsyncadd [#allocation6], %s26
      %s28 = sshll.u32 [#allocation5], 4
      %s29 = int_to_ptr.vmem [resolvable:$true] %s28
      %34 = dma.hbm_to_vmem [thread:$0]  %s1, 12288, %s29, [#allocation6], 256, 256, 16
    $region9: #{tpu_custom_call.1} parent=1 // pred_fallthru
      _
    // Predicated region
    $region10: #{tpu_custom_call.1} parent=1 // pred_check
      _
    $region11: #{tpu_custom_call.1} parent=1 // pred_check_branch
      %36 = sbr.rel (0) target = $region13
    $region12: #{tpu_custom_call.1} parent=1 // pred_region
      _
    $region13: #{tpu_custom_call.1} parent=1 // pred_fallthru
      _
    // Predicated region
    $region14: #{tpu_custom_call.1} parent=1 // pred_check
      _
    $region15: #{tpu_custom_call.1} parent=1 // pred_check_branch
      %38 = sbr.rel (0) target = $region17
    $region16: #{tpu_custom_call.1} parent=1 // pred_region
      %s40 = ssub.s32 4096, 4096
      %41 = vsyncadd [#allocation6], %s40
      %s42 = sshll.u32 [#allocation7], 4
      %s43 = int_to_ptr.vmem [resolvable:$true] %s42
      %48 = dma.hbm_to_vmem [thread:$0]  %s3, 4096, %s43, [#allocation6], 128, 128, 8
    $region17: #{tpu_custom_call.1} parent=1 // pred_fallthru
      _
    // Predicated region
    $region18: #{tpu_custom_call.1} parent=1 // pred_check
      _
    $region19: #{tpu_custom_call.1} parent=1 // pred_check_branch
      %50 = sbr.rel (0) target = $region21
    $region20: #{tpu_custom_call.1} parent=1 // pred_region
      _
    $region21: #{tpu_custom_call.1} parent=1 // pred_fallthru
      _
    // Predicated region
    $region22: #{tpu_custom_call.1} parent=1 // pred_check
      _
    $region23: #{tpu_custom_call.1} parent=1 // pred_check_branch
      %52 = sbr.rel (0) target = $region25
    $region24: #{tpu_custom_call.1} parent=1 // pred_region
      %53 = dma.done [#allocation3], 384
    $region25: #{tpu_custom_call.1} parent=1 // pred_fallthru
      _
    // Predicated region
    $region26: #{tpu_custom_call.1} parent=1 // pred_check
      _
    $region27: #{tpu_custom_call.1} parent=1 // pred_check_branch
      %55 = sbr.rel (0) target = $region29
    $region28: #{tpu_custom_call.1} parent=1 // pred_region
      %56 = dma.done [#allocation6], 12288
    $region29: #{tpu_custom_call.1} parent=1 // pred_fallthru
      _
    // Predicated region
    $region30: #{tpu_custom_call.1} parent=1 // pred_check
      _
    $region31: #{tpu_custom_call.1} parent=1 // pred_check_branch
      %58 = sbr.rel (0) target = $region33
    $region32: #{tpu_custom_call.1} parent=1 // pred_region
      %59 = dma.done [#allocation6], 4096
    $region33: #{tpu_custom_call.1} parent=1 // pred_fallthru
      _
    %v60 = vld [vmem:[#allocation2] sm:$0xff]
    %v61 = vld [vmem:[#allocation2 + $0x8] sm:$0xff]
    %v62 = vld [vmem:[#allocation2 + $0x10] sm:$0xff]
    %v63 = vld [vmem:[#allocation5] sm:$0xff]
    %v64 = vld [vmem:[#allocation5 + $0x8] sm:$0xff]
    %v65 = vld [vmem:[#allocation5 + $0x10] sm:$0xff]
    %v66 = vld [vmem:[#allocation5 + $0x18] sm:$0xff]
    %v67 = vld [vmem:[#allocation5 + $0x20] sm:$0xff]
    %v68 = vld [vmem:[#allocation5 + $0x28] sm:$0xff]
    %v69 = vld [vmem:[#allocation5 + $0x30] sm:$0xff]
    %v70 = vld [vmem:[#allocation5 + $0x38] sm:$0xff]
    %v71 = vld [vmem:[#allocation5 + $0x40] sm:$0xff]
    %v72 = vld [vmem:[#allocation5 + $0x48] sm:$0xff]
    %v73 = vld [vmem:[#allocation5 + $0x50] sm:$0xff]
    %v74 = vld [vmem:[#allocation5 + $0x58] sm:$0xff]
    %v75 = vld [vmem:[#allocation5 + $0x60] sm:$0xff]
    %v76 = vld [vmem:[#allocation5 + $0x68] sm:$0xff]
    %v77 = vld [vmem:[#allocation5 + $0x70] sm:$0xff]
    %v78 = vld [vmem:[#allocation5 + $0x78] sm:$0xff]
    %v79 = vld [vmem:[#allocation5 + $0x80] sm:$0xff]
    %v80 = vld [vmem:[#allocation5 + $0x88] sm:$0xff]
    %v81 = vld [vmem:[#allocation5 + $0x90] sm:$0xff]
    %v82 = vld [vmem:[#allocation5 + $0x98] sm:$0xff]
    %v83 = vld [vmem:[#allocation5 + $0xa0] sm:$0xff]
    %v84 = vld [vmem:[#allocation5 + $0xa8] sm:$0xff]
    %v85 = vld [vmem:[#allocation5 + $0xb0] sm:$0xff]
    %v86 = vld [vmem:[#allocation5 + $0xb8] sm:$0xff]
    %v87 = vld [vmem:[#allocation5 + $0xc0] sm:$0xff]
    %v88 = vld [vmem:[#allocation5 + $0xc8] sm:$0xff]
    %v89 = vld [vmem:[#allocation5 + $0xd0] sm:$0xff]
    %v90 = vld [vmem:[#allocation5 + $0xd8] sm:$0xff]
    %v91 = vld [vmem:[#allocation5 + $0xe0] sm:$0xff]
    %v92 = vld [vmem:[#allocation5 + $0xe8] sm:$0xff]
    %v93 = vld [vmem:[#allocation5 + $0xf0] sm:$0xff]
    %v94 = vld [vmem:[#allocation5 + $0xf8] sm:$0xff]
    %v95 = vld [vmem:[#allocation5 + $0x100] sm:$0xff]
    %v96 = vld [vmem:[#allocation5 + $0x108] sm:$0xff]
    %v97 = vld [vmem:[#allocation5 + $0x110] sm:$0xff]
    %v98 = vld [vmem:[#allocation5 + $0x118] sm:$0xff]
    %v99 = vld [vmem:[#allocation5 + $0x120] sm:$0xff]
    %v100 = vld [vmem:[#allocation5 + $0x128] sm:$0xff]
    %v101 = vld [vmem:[#allocation5 + $0x130] sm:$0xff]
    %v102 = vld [vmem:[#allocation5 + $0x138] sm:$0xff]
    %v103 = vld [vmem:[#allocation5 + $0x140] sm:$0xff]
    %v104 = vld [vmem:[#allocation5 + $0x148] sm:$0xff]
    %v105 = vld [vmem:[#allocation5 + $0x150] sm:$0xff]
    %v106 = vld [vmem:[#allocation5 + $0x158] sm:$0xff]
    %v107 = vld [vmem:[#allocation5 + $0x160] sm:$0xff]
    %v108 = vld [vmem:[#allocation5 + $0x168] sm:$0xff]
    %v109 = vld [vmem:[#allocation5 + $0x170] sm:$0xff]
    %v110 = vld [vmem:[#allocation5 + $0x178] sm:$0xff]
    %v111 = vld [vmem:[#allocation5 + $0x180] sm:$0xff]
    %v112 = vld [vmem:[#allocation5 + $0x188] sm:$0xff]
    %v113 = vld [vmem:[#allocation5 + $0x190] sm:$0xff]
    %v114 = vld [vmem:[#allocation5 + $0x198] sm:$0xff]
    %v115 = vld [vmem:[#allocation5 + $0x1a0] sm:$0xff]
    %v116 = vld [vmem:[#allocation5 + $0x1a8] sm:$0xff]
    %v117 = vld [vmem:[#allocation5 + $0x1b0] sm:$0xff]
    %v118 = vld [vmem:[#allocation5 + $0x1b8] sm:$0xff]
    %v119 = vld [vmem:[#allocation5 + $0x1c0] sm:$0xff]
    %v120 = vld [vmem:[#allocation5 + $0x1c8] sm:$0xff]
    %v121 = vld [vmem:[#allocation5 + $0x1d0] sm:$0xff]
    %v122 = vld [vmem:[#allocation5 + $0x1d8] sm:$0xff]
    %v123 = vld [vmem:[#allocation5 + $0x1e0] sm:$0xff]
    %v124 = vld [vmem:[#allocation5 + $0x1e8] sm:$0xff]
    %v125 = vld [vmem:[#allocation5 + $0x1f0] sm:$0xff]
    %v126 = vld [vmem:[#allocation5 + $0x1f8] sm:$0xff]
    %v127 = vld [vmem:[#allocation5 + $0x200] sm:$0xff]
    %v128 = vld [vmem:[#allocation5 + $0x208] sm:$0xff]
    %v129 = vld [vmem:[#allocation5 + $0x210] sm:$0xff]
    %v130 = vld [vmem:[#allocation5 + $0x218] sm:$0xff]
    %v131 = vld [vmem:[#allocation5 + $0x220] sm:$0xff]
    %v132 = vld [vmem:[#allocation5 + $0x228] sm:$0xff]
    %v133 = vld [vmem:[#allocation5 + $0x230] sm:$0xff]
    %v134 = vld [vmem:[#allocation5 + $0x238] sm:$0xff]
    %v135 = vld [vmem:[#allocation5 + $0x240] sm:$0xff]
    %v136 = vld [vmem:[#allocation5 + $0x248] sm:$0xff]
    %v137 = vld [vmem:[#allocation5 + $0x250] sm:$0xff]
    %v138 = vld [vmem:[#allocation5 + $0x258] sm:$0xff]
    %v139 = vld [vmem:[#allocation5 + $0x260] sm:$0xff]
    %v140 = vld [vmem:[#allocation5 + $0x268] sm:$0xff]
    %v141 = vld [vmem:[#allocation5 + $0x270] sm:$0xff]
    %v142 = vld [vmem:[#allocation5 + $0x278] sm:$0xff]
    %v143 = vld [vmem:[#allocation5 + $0x280] sm:$0xff]
    %v144 = vld [vmem:[#allocation5 + $0x288] sm:$0xff]
    %v145 = vld [vmem:[#allocation5 + $0x290] sm:$0xff]
    %v146 = vld [vmem:[#allocation5 + $0x298] sm:$0xff]
    %v147 = vld [vmem:[#allocation5 + $0x2a0] sm:$0xff]
    %v148 = vld [vmem:[#allocation5 + $0x2a8] sm:$0xff]
    %v149 = vld [vmem:[#allocation5 + $0x2b0] sm:$0xff]
    %v150 = vld [vmem:[#allocation5 + $0x2b8] sm:$0xff]
    %v151 = vld [vmem:[#allocation5 + $0x2c0] sm:$0xff]
    %v152 = vld [vmem:[#allocation5 + $0x2c8] sm:$0xff]
    %v153 = vld [vmem:[#allocation5 + $0x2d0] sm:$0xff]
    %v154 = vld [vmem:[#allocation5 + $0x2d8] sm:$0xff]
    %v155 = vld [vmem:[#allocation5 + $0x2e0] sm:$0xff]
    %v156 = vld [vmem:[#allocation5 + $0x2e8] sm:$0xff]
    %v157 = vld [vmem:[#allocation5 + $0x2f0] sm:$0xff]
    %v158 = vld [vmem:[#allocation5 + $0x2f8] sm:$0xff]
    %v159 = vld [vmem:[%s2] sm:$0x3]
    %v161 = vlaneseq
    %v162 = vshrl.u32 %v161, 7
    %v163 = vsub.s32 0, %v162
    %v164 = vrot.slane %v159, %v163
    %v165 = vlaneseq
    %v166 = vshrl.u32 %v165, 7
    %v167 = vsub.s32 1, %v166
    %v168 = vrot.slane %v159, %v167
    %171 = vmatprep.subr.mxu0 %v94
    %172 = vmatpush1.msra.mxu0 %v93
    %173 = vmatprep.subr.mxu0 %v92
    %174 = vmatpush1.msra.mxu0 %v91
    %175 = vmatprep.subr.mxu0 %v90
    %176 = vmatpush1.msra.mxu0 %v89
    %177 = vmatprep.subr.mxu0 %v88
    %178 = vmatpush1.msra.mxu0 %v87
    %179 = vmatprep.subr.mxu0 %v86
    %180 = vmatpush1.msra.mxu0 %v85
    %181 = vmatprep.subr.mxu0 %v84
    %182 = vmatpush1.msra.mxu0 %v83
    %183 = vmatprep.subr.mxu0 %v82
    %184 = vmatpush1.msra.mxu0 %v81
    %185 = vmatprep.subr.mxu0 %v80
    %186 = vmatpush1.msra.mxu0 %v79
    %187 = vmatprep.subr.mxu0 %v78
    %188 = vmatpush1.msra.mxu0 %v77
    %189 = vmatprep.subr.mxu0 %v76
    %190 = vmatpush1.msra.mxu0 %v75
    %191 = vmatprep.subr.mxu0 %v74
    %192 = vmatpush1.msra.mxu0 %v73
    %193 = vmatprep.subr.mxu0 %v72
    %194 = vmatpush1.msra.mxu0 %v71
    %195 = vmatprep.subr.mxu0 %v70
    %196 = vmatpush1.msra.mxu0 %v69
    %197 = vmatprep.subr.mxu0 %v68
    %198 = vmatpush1.msra.mxu0 %v67
    %199 = vmatprep.subr.mxu0 %v66
    %200 = vmatpush1.msra.mxu0 %v65
    %201 = vmatprep.subr.mxu0 %v64
    %202 = vmatpush1.msra.mxu0 %v63
    %203 = vmatprep.subr.mxu0 %v126
    %204 = vmatpush2.msra.mxu0 %v125
    %205 = vmatprep.subr.mxu0 %v124
    %206 = vmatpush2.msra.mxu0 %v123
    %207 = vmatprep.subr.mxu0 %v122
    %208 = vmatpush2.msra.mxu0 %v121
    %209 = vmatprep.subr.mxu0 %v120
    %210 = vmatpush2.msra.mxu0 %v119
    %211 = vmatprep.subr.mxu0 %v118
    %212 = vmatpush2.msra.mxu0 %v117
    %213 = vmatprep.subr.mxu0 %v116
    %214 = vmatpush2.msra.mxu0 %v115
    %215 = vmatprep.subr.mxu0 %v114
    %216 = vmatpush2.msra.mxu0 %v113
    %217 = vmatprep.subr.mxu0 %v112
    %218 = vmatpush2.msra.mxu0 %v111
    %219 = vmatprep.subr.mxu0 %v110
    %220 = vmatpush2.msra.mxu0 %v109
    %221 = vmatprep.subr.mxu0 %v108
    %222 = vmatpush2.msra.mxu0 %v107
    %223 = vmatprep.subr.mxu0 %v106
    %224 = vmatpush2.msra.mxu0 %v105
    %225 = vmatprep.subr.mxu0 %v104
    %226 = vmatpush2.msra.mxu0 %v103
    %227 = vmatprep.subr.mxu0 %v102
    %228 = vmatpush2.msra.mxu0 %v101
    %229 = vmatprep.subr.mxu0 %v100
    %230 = vmatpush2.msra.mxu0 %v99
    %231 = vmatprep.subr.mxu0 %v98
    %232 = vmatpush2.msra.mxu0 %v97
    %233 = vmatprep.subr.mxu0 %v96
    %234 = vmatpush2.msra.mxu0 %v95
    %235 = vmatprep.mubr.f32.mxu0 %v61
    %236 = vmatmul.mubr.f32.gmra.mxu0 %v60
    %v237 = vpop.f32.mrf.mxu0
    %v238 = vadd.f32 %v164, %v237
    %v239 = vpop.f32.mrf.mxu0
    %v240 = vadd.f32 %v168, %v239
    %241 = vdwg.mxu0
    %242 = vmatprep.subr.mxu0 %v158
    %243 = vmatpush1.msra.mxu0 %v157
    %244 = vmatprep.subr.mxu0 %v156
    %245 = vmatpush1.msra.mxu0 %v155
    %246 = vmatprep.subr.mxu0 %v154
    %247 = vmatpush1.msra.mxu0 %v153
    %248 = vmatprep.subr.mxu0 %v152
    %249 = vmatpush1.msra.mxu0 %v151
    %250 = vmatprep.subr.mxu0 %v150
    %251 = vmatpush1.msra.mxu0 %v149
    %252 = vmatprep.subr.mxu0 %v148
    %253 = vmatpush1.msra.mxu0 %v147
    %254 = vmatprep.subr.mxu0 %v146
    %255 = vmatpush1.msra.mxu0 %v145
    %256 = vmatprep.subr.mxu0 %v144
    %257 = vmatpush1.msra.mxu0 %v143
    %258 = vmatprep.subr.mxu0 %v142
    %259 = vmatpush1.msra.mxu0 %v141
    %260 = vmatprep.subr.mxu0 %v140
    %261 = vmatpush1.msra.mxu0 %v139
    %262 = vmatprep.subr.mxu0 %v138
    %263 = vmatpush1.msra.mxu0 %v137
    %264 = vmatprep.subr.mxu0 %v136
    %265 = vmatpush1.msra.mxu0 %v135
    %266 = vmatprep.subr.mxu0 %v134
    %267 = vmatpush1.msra.mxu0 %v133
    %268 = vmatprep.subr.mxu0 %v132
    %269 = vmatpush1.msra.mxu0 %v131
    %270 = vmatprep.subr.mxu0 %v130
    %271 = vmatpush1.msra.mxu0 %v129
    %272 = vmatprep.subr.mxu0 %v128
    %273 = vmatpush1.msra.mxu0 %v127
    %274 = vmatprep.subr.mxu0 0.0
    %275 = vmatpush2.msra.mxu0 0.0
    %276 = vmatprep.subr.mxu0 0.0
    %277 = vmatpush2.msra.mxu0 0.0
    %278 = vmatprep.subr.mxu0 0.0
    %279 = vmatpush2.msra.mxu0 0.0
    %280 = vmatprep.subr.mxu0 0.0
    %281 = vmatpush2.msra.mxu0 0.0
    %282 = vmatprep.subr.mxu0 0.0
    %283 = vmatpush2.msra.mxu0 0.0
    %284 = vmatprep.subr.mxu0 0.0
    %285 = vmatpush2.msra.mxu0 0.0
    %286 = vmatprep.subr.mxu0 0.0
    %287 = vmatpush2.msra.mxu0 0.0
    %288 = vmatprep.subr.mxu0 0.0
    %289 = vmatpush2.msra.mxu0 0.0
    %290 = vmatprep.subr.mxu0 0.0
    %291 = vmatpush2.msra.mxu0 0.0
    %292 = vmatprep.subr.mxu0 0.0
    %293 = vmatpush2.msra.mxu0 0.0
    %294 = vmatprep.subr.mxu0 0.0
    %295 = vmatpush2.msra.mxu0 0.0
    %296 = vmatprep.subr.mxu0 0.0
    %297 = vmatpush2.msra.mxu0 0.0
    %298 = vmatprep.subr.mxu0 0.0
    %299 = vmatpush2.msra.mxu0 0.0
    %300 = vmatprep.subr.mxu0 0.0
    %301 = vmatpush2.msra.mxu0 0.0
    %302 = vmatprep.subr.mxu0 0.0
    %303 = vmatpush2.msra.mxu0 0.0
    %304 = vmatprep.subr.mxu0 0.0
    %305 = vmatpush2.msra.mxu0 0.0
    %306 = vmatprep.mubr.f32.mxu0 0.0
    %307 = vmatmul.mubr.f32.gmra.mxu0 %v62
    %v308 = vpop.f32.mrf.mxu0
    %v309 = vadd.f32 %v238, %v308
    %v310 = vpop.f32.mrf.mxu0
    %v311 = vadd.f32 %v240, %v310
    %312 = vdwg.mxu0
    %v313 = vmax.f32 %v309, 0.0
    %v314 = vmax.f32 %v311, 0.0
    %v315 = vld [vmem:[#allocation7] sm:$0xff]
    %v316 = vld [vmem:[#allocation7 + $0x8] sm:$0xff]
    %v317 = vld [vmem:[#allocation7 + $0x10] sm:$0xff]
    %v318 = vld [vmem:[#allocation7 + $0x18] sm:$0xff]
    %v319 = vld [vmem:[#allocation7 + $0x20] sm:$0xff]
    %v320 = vld [vmem:[#allocation7 + $0x28] sm:$0xff]
    %v321 = vld [vmem:[#allocation7 + $0x30] sm:$0xff]
    %v322 = vld [vmem:[#allocation7 + $0x38] sm:$0xff]
    %v323 = vld [vmem:[#allocation7 + $0x40] sm:$0xff]
    %v324 = vld [vmem:[#allocation7 + $0x48] sm:$0xff]
    %v325 = vld [vmem:[#allocation7 + $0x50] sm:$0xff]
    %v326 = vld [vmem:[#allocation7 + $0x58] sm:$0xff]
    %v327 = vld [vmem:[#allocation7 + $0x60] sm:$0xff]
    %v328 = vld [vmem:[#allocation7 + $0x68] sm:$0xff]
    %v329 = vld [vmem:[#allocation7 + $0x70] sm:$0xff]
    %v330 = vld [vmem:[#allocation7 + $0x78] sm:$0xff]
    %v331 = vld [vmem:[#allocation7 + $0x80] sm:$0xff]
    %v332 = vld [vmem:[#allocation7 + $0x88] sm:$0xff]
    %v333 = vld [vmem:[#allocation7 + $0x90] sm:$0xff]
    %v334 = vld [vmem:[#allocation7 + $0x98] sm:$0xff]
    %v335 = vld [vmem:[#allocation7 + $0xa0] sm:$0xff]
    %v336 = vld [vmem:[#allocation7 + $0xa8] sm:$0xff]
    %v337 = vld [vmem:[#allocation7 + $0xb0] sm:$0xff]
    %v338 = vld [vmem:[#allocation7 + $0xb8] sm:$0xff]
    %v339 = vld [vmem:[#allocation7 + $0xc0] sm:$0xff]
    %v340 = vld [vmem:[#allocation7 + $0xc8] sm:$0xff]
    %v341 = vld [vmem:[#allocation7 + $0xd0] sm:$0xff]
    %v342 = vld [vmem:[#allocation7 + $0xd8] sm:$0xff]
    %v343 = vld [vmem:[#allocation7 + $0xe0] sm:$0xff]
    %v344 = vld [vmem:[#allocation7 + $0xe8] sm:$0xff]
    %v345 = vld [vmem:[#allocation7 + $0xf0] sm:$0xff]
    %v346 = vld [vmem:[#allocation7 + $0xf8] sm:$0xff]
    %v347 = vld [vmem:[%s4] sm:$0x1]
    %v349 = vlaneseq
    %v350 = vshrl.u32 %v349, 7
    %v351 = vsub.s32 0, %v350
    %v352 = vrot.slane %v347, %v351
    %354 = vmatprep.subr.mxu0 0.0
    %355 = vmatpush1.msra.mxu0 %v330
    %356 = vmatprep.subr.mxu0 0.0
    %357 = vmatpush1.msra.mxu0 %v329
    %358 = vmatprep.subr.mxu0 0.0
    %359 = vmatpush1.msra.mxu0 %v328
    %360 = vmatprep.subr.mxu0 0.0
    %361 = vmatpush1.msra.mxu0 %v327
    %362 = vmatprep.subr.mxu0 0.0
    %363 = vmatpush1.msra.mxu0 %v326
    %364 = vmatprep.subr.mxu0 0.0
    %365 = vmatpush1.msra.mxu0 %v325
    %366 = vmatprep.subr.mxu0 0.0
    %367 = vmatpush1.msra.mxu0 %v324
    %368 = vmatprep.subr.mxu0 0.0
    %369 = vmatpush1.msra.mxu0 %v323
    %370 = vmatprep.subr.mxu0 0.0
    %371 = vmatpush1.msra.mxu0 %v322
    %372 = vmatprep.subr.mxu0 0.0
    %373 = vmatpush1.msra.mxu0 %v321
    %374 = vmatprep.subr.mxu0 0.0
    %375 = vmatpush1.msra.mxu0 %v320
    %376 = vmatprep.subr.mxu0 0.0
    %377 = vmatpush1.msra.mxu0 %v319
    %378 = vmatprep.subr.mxu0 0.0
    %379 = vmatpush1.msra.mxu0 %v318
    %380 = vmatprep.subr.mxu0 0.0
    %381 = vmatpush1.msra.mxu0 %v317
    %382 = vmatprep.subr.mxu0 0.0
    %383 = vmatpush1.msra.mxu0 %v316
    %384 = vmatprep.subr.mxu0 0.0
    %385 = vmatpush1.msra.mxu0 %v315
    %386 = vmatprep.subr.mxu0 0.0
    %387 = vmatpush2.msra.mxu0 %v346
    %388 = vmatprep.subr.mxu0 0.0
    %389 = vmatpush2.msra.mxu0 %v345
    %390 = vmatprep.subr.mxu0 0.0
    %391 = vmatpush2.msra.mxu0 %v344
    %392 = vmatprep.subr.mxu0 0.0
    %393 = vmatpush2.msra.mxu0 %v343
    %394 = vmatprep.subr.mxu0 0.0
    %395 = vmatpush2.msra.mxu0 %v342
    %396 = vmatprep.subr.mxu0 0.0
    %397 = vmatpush2.msra.mxu0 %v341
    %398 = vmatprep.subr.mxu0 0.0
    %399 = vmatpush2.msra.mxu0 %v340
    %400 = vmatprep.subr.mxu0 0.0
    %401 = vmatpush2.msra.mxu0 %v339
    %402 = vmatprep.subr.mxu0 0.0
    %403 = vmatpush2.msra.mxu0 %v338
    %404 = vmatprep.subr.mxu0 0.0
    %405 = vmatpush2.msra.mxu0 %v337
    %406 = vmatprep.subr.mxu0 0.0
    %407 = vmatpush2.msra.mxu0 %v336
    %408 = vmatprep.subr.mxu0 0.0
    %409 = vmatpush2.msra.mxu0 %v335
    %410 = vmatprep.subr.mxu0 0.0
    %411 = vmatpush2.msra.mxu0 %v334
    %412 = vmatprep.subr.mxu0 0.0
    %413 = vmatpush2.msra.mxu0 %v333
    %414 = vmatprep.subr.mxu0 0.0
    %415 = vmatpush2.msra.mxu0 %v332
    %416 = vmatprep.subr.mxu0 0.0
    %417 = vmatpush2.msra.mxu0 %v331
    %418 = vmatprep.mubr.f32.mxu0 %v314
    %419 = vmatmul.mubr.f32.gmra.mxu0 %v313
    %v420 = vpop.f32.mrf.mxu0
    %v421 = vadd.f32 %v352, %v420
    %v422 = vpop.f32.mrf.mxu0
    %423 = vdwg.mxu0
    %424 = vst [vmem:[#allocation8] sm:$0xff] %v421
    // Predicated region
    $region34: #{tpu_custom_call.1} parent=1 // pred_check
      _
    $region35: #{tpu_custom_call.1} parent=1 // pred_check_branch
      %426 = sbr.rel (0) target = $region37
    $region36: #{tpu_custom_call.1} parent=1 // pred_region
      %s428 = ssub.s32 128, 128
      %429 = vsyncadd [#allocation4], %s428
      %s431 = sshll.u32 [#allocation8], 4
      %s432 = int_to_ptr.vmem [resolvable:$true] %s431
      %434 = dma.vmem_to_hbm [thread:$0]  %s432, 128, %s5, [#allocation4]
    $region37: #{tpu_custom_call.1} parent=1 // pred_fallthru
      _
    // Predicated region
    $region38: #{tpu_custom_call.1} parent=1 // pred_check
      _
    $region39: #{tpu_custom_call.1} parent=1 // pred_check_branch
      %436 = sbr.rel (0) target = $region41
    $region40: #{tpu_custom_call.1} parent=1 // pred_region
      %437 = dma.done [#allocation4], 128
    $region41: #{tpu_custom_call.1} parent=1 // pred_fallthru
      _
    %438 = vsyncpa [#allocation3], 1
    %439 = vsyncpa [#allocation6], 1
    %440 = vsyncpa [#allocation4], 1

</llo_original>
